<compile_context>
chip_gen: v5e
topology: v5e:2x2
jax: 0.10.0
libtpu: 0.0.40
codegen_flags: <defaults>
</compile_context>

<pallas_src>
import functools

import jax
import jax.numpy as jnp
from jax.experimental import pallas as pl
from jax.experimental.pallas import tpu as pltpu


def _round_up(x: int, m: int) -> int:
    return ((x + m - 1) // m) * m


def _spec(shape, index_map, *, single_buffer=False):
    """BlockSpec helper; single_buffer=True marks a constant-index resident
    block as Buffered(1) (no double-buffering -> half the VMEM footprint)."""
    if single_buffer:
        return pl.BlockSpec(shape, index_map, pipeline_mode=pl.Buffered(1))
    return pl.BlockSpec(shape, index_map)


# ----------------------------------------------------------------------------
# Kernels
# ----------------------------------------------------------------------------
def _project_kernel(nf_ref, w_ref, x_ref):
    """X = nf @ W (lane-dense padded columns), stored in x_ref.dtype."""
    x_ref[...] = jnp.dot(nf_ref[...], w_ref[...],
                         preferred_element_type=jnp.float32).astype(x_ref.dtype)


def _project_attn_kernel(nf_ref, w_ref, v_ref, x_ref, f_ref):
    """X = nf @ W (emitted directly in agg dtype) and fused f = X @ [v0|v1]
    computed from the f32 MXU accumulator (no precision loss on the logits)."""
    x = jnp.dot(nf_ref[...], w_ref[...], preferred_element_type=jnp.float32)
    x_ref[...] = x.astype(x_ref.dtype)
    f_ref[...] = jnp.dot(x, v_ref[...], preferred_element_type=jnp.float32)


def _attention_rows_kernel(graph_ref, f0_ref, f1_ref, x_ref, out_ref,
                           alphas_ref, *, eup_dtype):
    """One (TM, N) row block: masked row softmax + aggregation + ELU.
    Writes alphas (needed for tied reuse / module's self.alphas)."""
    # E = graph * (f0 + f1^T).  vals = sigmoid(E)-0.5 in (-0.5,0.5), so the
    # softmax needs no max stabilization (exp can never overflow).
    e = graph_ref[...].astype(jnp.float32) * (f0_ref[...] + f1_ref[...])
    mask = e != 0.0            # torch .to_sparse(): entries with E == 0 dropped
    vals = jax.nn.sigmoid(e.astype(eup_dtype)) - 0.5
    ex = jnp.where(mask, jnp.exp(vals).astype(jnp.float32), 0.0)
    denom = jnp.sum(ex, axis=1, keepdims=True)
    inv = pl.reciprocal(jnp.where(denom > 0.0, denom, 1.0), approx=True)
    alphas = ex * inv                               # all-masked rows stay zero
    alphas_ref[...] = alphas.astype(alphas_ref.dtype)
    xa = jnp.dot(alphas.astype(x_ref.dtype), x_ref[...],
                 preferred_element_type=jnp.float32)
    out_ref[...] = jnp.where(xa > 0.0, xa, jnp.exp(xa) - 1.0)   # ELU(alpha=1)


def _attention_flash_kernel(graph_ref, f0_ref, f1_ref, x_ref, out_ref,
                            acc_ref, den_ref, *, n_nodes, eup_dtype):
    """Flash-style column-tiled path (no alphas writeback, O(TM*TN) VMEM).
    Because vals is bounded, no running max is needed: accumulate
    acc += ex_chunk @ X_chunk and denom += sum(ex_chunk), normalize at the end."""
    j = pl.program_id(1)
    tn = graph_ref.shape[1]

    @pl.when(j == 0)
    def _():
        acc_ref[...] = jnp.zeros_like(acc_ref)
        den_ref[...] = jnp.zeros_like(den_ref)

    e = graph_ref[...].astype(jnp.float32) * (f0_ref[...] + f1_ref[...])
    col = jax.lax.broadcasted_iota(jnp.int32, (1, tn), 1) + j * tn
    mask = (e != 0.0) & (col < n_nodes)             # also masks padded columns
    vals = jax.nn.sigmoid(e.astype(eup_dtype)) - 0.5
    ex = jnp.where(mask, jnp.exp(vals).astype(jnp.float32), 0.0)
    den_ref[...] += jnp.sum(ex, axis=1, keepdims=True)

    row_ok = (jax.lax.broadcasted_iota(jnp.int32, (tn, 1), 0) + j * tn) < n_nodes
    xv = jnp.where(row_ok, x_ref[...], 0)           # zero padded X rows
    acc_ref[...] += jnp.dot(ex.astype(x_ref.dtype), xv,
                            preferred_element_type=jnp.float32)

    @pl.when(j == pl.num_programs(1) - 1)
    def _():
        den = den_ref[...]
        inv = pl.reciprocal(jnp.where(den > 0.0, den, 1.0), approx=True)
        xa = acc_ref[...] * inv
        out_ref[...] = jnp.where(xa > 0.0, xa, jnp.exp(xa) - 1.0)


def _aggregate_kernel(alphas_ref, x_ref, out_ref):
    """Tied-alphas path: elu(alphas @ X) on one (TM, N) row block."""
    xa = jnp.dot(alphas_ref[...].astype(x_ref.dtype), x_ref[...],
                 preferred_element_type=jnp.float32)
    out_ref[...] = jnp.where(xa > 0.0, xa, jnp.exp(xa) - 1.0)


# ----------------------------------------------------------------------------
# Wrapper
# ----------------------------------------------------------------------------
def gat_layer(node_features, graph, W, v0, v1, *, is_last=False,
              tied_alphas=None, need_alphas=True,
              tile_rows=128, tile_cols=512,
              agg_dtype=jnp.bfloat16, alphas_dtype=jnp.bfloat16,
              eup_dtype=jnp.float32, graph_compute_dtype=None,
              single_buffer_residents=False, vmem_limit_bytes=None):
    """Pallas implementation of GATlayer.forward.  Returns (X_out, alphas);
    alphas is None on the is_last / tied / need_alphas=False paths.

    Knobs (per-generation tuning):
      tile_rows/tile_cols : row / column block sizes.  v6e: tile_rows 256 and
        vmem_limit_bytes ~64-96 MiB; v7x (64 MiB VMEM): tile_rows 64-128,
        vmem_limit_bytes ~48 MiB, and prefer need_alphas=False (flash path).
      graph_compute_dtype : cast the adjacency before the N^2 read (int8 cuts
        the dominant HBM stream 4x; lossless only for 0/1 graphs).
      alphas_dtype        : dtype of the N^2 alphas writeback (bf16 halves it).
      eup_dtype           : dtype of the sigmoid/exp chain (bf16 on v6e/v7x;
        keep f32 on v5e, whose EUP has no bf16 path).
      single_buffer_residents : pl.Buffered(1) on constant-index resident
        blocks (X, f1 row, W, V) to halve their VMEM footprint.
    """
    N, D_in = node_features.shape
    D_out = W.shape[1]
    D_pad = _round_up(D_out, 128)            # lane-dense output columns

    TM = N if N <= tile_rows else max(8, (tile_rows // 8) * 8)
    row_grid = (pl.cdiv(N, TM),)
    cparams_rows = pltpu.CompilerParams(dimension_semantics=("parallel",),
                                        vmem_limit_bytes=vmem_limit_bytes)
    sb = single_buffer_residents

    W_pad = jnp.pad(W, ((0, 0), (0, D_pad - D_out)))

    # ---- is_last: pure projection ------------------------------------------
    if is_last:
        out_dtype = jnp.result_type(node_features.dtype, W.dtype)
        x_pad = pl.pallas_call(
            _project_kernel,
            out_shape=jax.ShapeDtypeStruct((N, D_pad), out_dtype),
            grid=row_grid,
            in_specs=[pl.BlockSpec((TM, D_in), lambda i: (i, 0)),
                      _spec((D_in, D_pad), lambda i: (0, 0), single_buffer=sb)],
            out_specs=pl.BlockSpec((TM, D_pad), lambda i: (i, 0)),
            compiler_params=cparams_rows,
        )(node_features, W_pad)
        return x_pad[:, :D_out], None

    # ---- tied-alphas: projection (bf16 X) + aggregation ---------------------
    if tied_alphas is not None:
        x_agg = pl.pallas_call(
            _project_kernel,
            out_shape=jax.ShapeDtypeStruct((N, D_pad), agg_dtype),
            grid=row_grid,
            in_specs=[pl.BlockSpec((TM, D_in), lambda i: (i, 0)),
                      _spec((D_in, D_pad), lambda i: (0, 0), single_buffer=sb)],
            out_specs=pl.BlockSpec((TM, D_pad), lambda i: (i, 0)),
            compiler_params=cparams_rows,
        )(node_features, W_pad)
        x_out_pad = pl.pallas_call(
            _aggregate_kernel,
            out_shape=jax.ShapeDtypeStruct((N, D_pad), jnp.float32),
            grid=row_grid,
            in_specs=[pl.BlockSpec((TM, N), lambda i: (i, 0)),
                      _spec((N, D_pad), lambda i: (0, 0), single_buffer=sb)],
            out_specs=pl.BlockSpec((TM, D_pad), lambda i: (i, 0)),
            compiler_params=cparams_rows,
        )(tied_alphas, x_agg)
        return x_out_pad[:, :D_out], None

    # ---- projection: X (agg dtype) + fused attention logits f = X @ [v0|v1] -
    V_pad = jnp.pad(jnp.concatenate([v0, v1], axis=1),
                    ((0, D_pad - D_out), (0, 0)))          # (D_pad, 2)
    x_agg, f = pl.pallas_call(
        _project_attn_kernel,
        out_shape=(jax.ShapeDtypeStruct((N, D_pad), agg_dtype),
                   jax.ShapeDtypeStruct((N, 2), jnp.float32)),
        grid=row_grid,
        in_specs=[pl.BlockSpec((TM, D_in), lambda i: (i, 0)),
                  _spec((D_in, D_pad), lambda i: (0, 0), single_buffer=sb),
                  _spec((D_pad, 2), lambda i: (0, 0), single_buffer=sb)],
        out_specs=(pl.BlockSpec((TM, D_pad), lambda i: (i, 0)),
                   pl.BlockSpec((TM, 2), lambda i: (i, 0))),
        compiler_params=cparams_rows,
    )(node_features, W_pad, V_pad)

    f0 = f[:, 0:1]                            # (N, 1) per-row logit term
    f1_row = f[:, 1:2].T                      # (1, N) per-column logit term

    if graph_compute_dtype is not None:       # e.g. int8: 4x smaller N^2 read
        graph = graph.astype(graph_compute_dtype)

    g_bytes = jnp.dtype(graph.dtype).itemsize
    x_bytes = jnp.dtype(agg_dtype).itemsize

    if need_alphas:
        a_bytes = jnp.dtype(alphas_dtype).itemsize
        cost = pl.CostEstimate(
            flops=int(2 * N * N * D_pad + 8 * N * N),
            transcendentals=int(2 * N * N),
            bytes_accessed=int(N * N * (g_bytes + a_bytes)
                               + N * D_pad * (x_bytes + 4) + 3 * N * 4))
        kern = functools.partial(_attention_rows_kernel, eup_dtype=eup_dtype)
        x_out_pad, alphas = pl.pallas_call(
            kern,
            out_shape=(jax.ShapeDtypeStruct((N, D_pad), jnp.float32),
                       jax.ShapeDtypeStruct((N, N), alphas_dtype)),
            grid=row_grid,
            in_specs=[pl.BlockSpec((TM, N), lambda i: (i, 0)),      # graph rows
                      pl.BlockSpec((TM, 1), lambda i: (i, 0)),      # f0
                      _spec((1, N), lambda i: (0, 0), single_buffer=sb),
                      _spec((N, D_pad), lambda i: (0, 0), single_buffer=sb)],
            out_specs=(pl.BlockSpec((TM, D_pad), lambda i: (i, 0)),
                       pl.BlockSpec((TM, N), lambda i: (i, 0))),
            compiler_params=cparams_rows,
            cost_estimate=cost,
        )(graph, f0, f1_row, x_agg)
        return x_out_pad[:, :D_out], alphas

    # ---- flash-style column-tiled path (no N^2 alphas writeback) ------------
    # TODO(synk): producing normalized alphas from this path would need a
    # second pass over the stored ex chunks; use need_alphas=True for that.
    TN = N if N <= tile_cols else max(128, (tile_cols // 128) * 128)
    grid = (pl.cdiv(N, TM), pl.cdiv(N, TN))
    cparams_2d = pltpu.CompilerParams(
        dimension_semantics=("parallel", "arbitrary"),
        vmem_limit_bytes=vmem_limit_bytes)
    cost = pl.CostEstimate(
        flops=int(2 * N * N * D_pad + 8 * N * N),
        transcendentals=int(2 * N * N),
        bytes_accessed=int(N * N * g_bytes + N * D_pad * (x_bytes + 4) + 3 * N * 4))
    kern = functools.partial(_attention_flash_kernel, n_nodes=N,
                             eup_dtype=eup_dtype)
    x_out_pad = pl.pallas_call(
        kern,
        out_shape=jax.ShapeDtypeStruct((N, D_pad), jnp.float32),
        grid=grid,
        in_specs=[pl.BlockSpec((TM, TN), lambda i, j: (i, j)),      # graph tile
                  pl.BlockSpec((TM, 1), lambda i, j: (i, 0)),       # f0
                  pl.BlockSpec((1, TN), lambda i, j: (0, j)),       # f1 chunk
                  pl.BlockSpec((TN, D_pad), lambda i, j: (j, 0))],  # X chunk
        out_specs=pl.BlockSpec((TM, D_pad), lambda i, j: (i, 0)),
        scratch_shapes=[pltpu.VMEM((TM, D_pad), jnp.float32),       # acc
                        pltpu.VMEM((TM, 1), jnp.float32)],          # denom
        compiler_params=cparams_2d,
        cost_estimate=cost,
    )(graph, f0, f1_row, x_agg)
    return x_out_pad[:, :D_out], None


# ----------------------------------------------------------------------------
# Pure-JAX reference (sanity check)
# ----------------------------------------------------------------------------
def gat_layer_ref(node_features, graph, W, v0, v1):
    X = node_features @ W
    f0 = X @ v0
    f1 = X @ v1
    E = graph * (f0 + f1.T)
    vals = jax.nn.sigmoid(E) - 0.5
    mask = E != 0.0          # to_sparse keeps vals != 0  <=>  E != 0
    ex = jnp.where(mask, jnp.exp(vals), 0.0)
    denom = jnp.sum(ex, axis=1, keepdims=True)
    alphas = jnp.where(denom > 0.0, ex / jnp.where(denom > 0.0, denom, 1.0), 0.0)
    Xa = alphas @ X
    return jnp.where(Xa > 0.0, Xa, jnp.exp(Xa) - 1.0), alphas


def xavier_uniform(key, shape):
    fan_in, fan_out = shape[0], shape[1]
    bound = (6.0 / (fan_in + fan_out)) ** 0.5
    return jax.random.uniform(key, shape, jnp.float32, -bound, bound)


if __name__ == "__main__":
    key = jax.random.PRNGKey(0)
    k_nf, k_g, k_w, k_v0, k_v1 = jax.random.split(key, 5)

    N, D_in, D_out = 256, 16, 32

    node_features = jax.random.normal(k_nf, (N, D_in), jnp.float32)
    # dense 0/1 adjacency with self-loops, ~50% connectivity
    graph = jax.random.bernoulli(k_g, 0.5, (N, N)).astype(jnp.float32)
    graph = jnp.maximum(graph, jnp.eye(N, dtype=jnp.float32))

    W = xavier_uniform(k_w, (D_in, D_out))
    v0 = xavier_uniform(k_v0, (D_out, 1))
    v1 = xavier_uniform(k_v1, (D_out, 1))

    x_ref, a_ref = gat_layer_ref(node_features, graph, W, v0, v1)

    # full path: row-tiled, int8 graph read, bf16 alphas writeback
    x_out, alphas = gat_layer(node_features, graph, W, v0, v1,
                              tile_rows=128, graph_compute_dtype=jnp.int8)
    jax.block_until_ready((x_out, alphas))
    assert alphas is not None
    assert jnp.allclose(alphas.astype(jnp.float32), a_ref,
                        rtol=1e-2, atol=1e-3), "alphas mismatch"
    assert jnp.allclose(x_out, x_ref, rtol=2e-2, atol=2e-3), "X mismatch"

    # alphas-free flash path: column-tiled (2 column blocks), no N^2 writeback
    x_flash, a_none = gat_layer(node_features, graph, W, v0, v1,
                                need_alphas=False, tile_rows=128, tile_cols=128,
                                graph_compute_dtype=jnp.int8)
    jax.block_until_ready(x_flash)
    assert a_none is None
    assert jnp.allclose(x_flash, x_ref, rtol=2e-2, atol=2e-3), "flash X mismatch"

    # tied-alphas path (reuses the bf16 alphas produced above)
    x_tied, _ = gat_layer(node_features, graph, W, v0, v1,
                          tied_alphas=alphas, tile_rows=128)
    jax.block_until_ready(x_tied)
    assert jnp.allclose(x_tied, x_out, rtol=1e-3, atol=1e-3), "tied mismatch"

    # is_last path (pure projection)
    x_last, _ = gat_layer(node_features, graph, W, v0, v1, is_last=True)
    jax.block_until_ready(x_last)
    assert jnp.allclose(x_last, node_features @ W, rtol=1e-2, atol=1e-3), \
        "is_last mismatch"

    print("KERNEL_OK")
</pallas_src>

<mosaic_0001>
module attributes {stable_mosaic.version = 11 : i64} {
  func.func @_project_attn_kernel(%arg0: i32, %arg1: memref<128x16xf32, #tpu.memory_space<vmem>>, %arg2: memref<16x128xf32, #tpu.memory_space<vmem>>, %arg3: memref<128x2xf32, #tpu.memory_space<vmem>>, %arg4: memref<128x128xbf16, #tpu.memory_space<vmem>>, %arg5: memref<128x2xf32, #tpu.memory_space<vmem>>) attributes {dimension_semantics = [#tpu.dimension_semantics<parallel>], iteration_bounds = array<i64: 2>, scalar_prefetch = 0 : i64, scratch_operands = 0 : i64, tpu.core_type = #tpu.core_type<tc>, window_params = [{transform_indices = @transform_0, window_bounds = array<i64: 128, 16>}, {pipeline_mode = #tpu.pipeline_mode<synchronous>, transform_indices = @transform_1, window_bounds = array<i64: 16, 128>}, {pipeline_mode = #tpu.pipeline_mode<synchronous>, transform_indices = @transform_2, window_bounds = array<i64: 128, 2>}, {transform_indices = @transform_3, window_bounds = array<i64: 128, 128>}, {transform_indices = @transform_4, window_bounds = array<i64: 128, 2>}]} {
    %c0 = arith.constant 0 : index
    %c0_0 = arith.constant 0 : index
    %0 = vector.load %arg1[%c0, %c0_0] : memref<128x16xf32, #tpu.memory_space<vmem>>, vector<128x16xf32>
    %c0_1 = arith.constant 0 : index
    %c0_2 = arith.constant 0 : index
    %1 = vector.load %arg2[%c0_1, %c0_2] : memref<16x128xf32, #tpu.memory_space<vmem>>, vector<16x128xf32>
    %cst = arith.constant dense<0.000000e+00> : vector<128x128xf32>
    %2 = tpu.matmul %0, %1, %cst {dimension_numbers = #tpu.dot_dimension_numbers<[1], [0], [0], [1], [0, 0, 1, 1], [], []>} : vector<128x16xf32>, vector<16x128xf32>, vector<128x128xf32> -> vector<128x128xf32>
    %3 = arith.truncf %2 : vector<128x128xf32> to vector<128x128xbf16>
    %c0_3 = arith.constant 0 : index
    %c0_4 = arith.constant 0 : index
    %4 = vector.load %arg4[%c0_3, %c0_4] : memref<128x128xbf16, #tpu.memory_space<vmem>>, vector<128x128xbf16>
    tpu.vector_store %arg4[%c0_3, %c0_4], %3 {strides = array<i32>} : memref<128x128xbf16, #tpu.memory_space<vmem>>, vector<128x128xbf16>,
    %c0_5 = arith.constant 0 : index
    %c0_6 = arith.constant 0 : index
    %5 = vector.load %arg3[%c0_5, %c0_6] : memref<128x2xf32, #tpu.memory_space<vmem>>, vector<128x2xf32>
    %cst_7 = arith.constant dense<0.000000e+00> : vector<128x2xf32>
    %6 = tpu.matmul %2, %5, %cst_7 {dimension_numbers = #tpu.dot_dimension_numbers<[1], [0], [0], [1], [0, 0, 1, 1], [], []>} : vector<128x128xf32>, vector<128x2xf32>, vector<128x2xf32> -> vector<128x2xf32>
    %c0_8 = arith.constant 0 : index
    %c0_9 = arith.constant 0 : index
    %7 = vector.load %arg5[%c0_8, %c0_9] : memref<128x2xf32, #tpu.memory_space<vmem>>, vector<128x2xf32>
    tpu.vector_store %arg5[%c0_8, %c0_9], %6 {strides = array<i32>} : memref<128x2xf32, #tpu.memory_space<vmem>>, vector<128x2xf32>,
    return
  }
  func.func @transform_0(%arg0: i32) -> (i32, i32) {
    %c0_i32 = arith.constant 0 : i32
    %c0_i32_0 = arith.constant 0 : i32
    return %arg0, %c0_i32 : i32, i32
  }
  func.func @transform_1(%arg0: i32) -> (i32, i32) {
    %c0_i32 = arith.constant 0 : i32
    %c0_i32_0 = arith.constant 0 : i32
    %c0_i32_1 = arith.constant 0 : i32
    return %c0_i32, %c0_i32_0 : i32, i32
  }
  func.func @transform_2(%arg0: i32) -> (i32, i32) {
    %c0_i32 = arith.constant 0 : i32
    %c0_i32_0 = arith.constant 0 : i32
    %c0_i32_1 = arith.constant 0 : i32
    return %c0_i32, %c0_i32_0 : i32, i32
  }
  func.func @transform_3(%arg0: i32) -> (i32, i32) {
    %c0_i32 = arith.constant 0 : i32
    %c0_i32_0 = arith.constant 0 : i32
    return %arg0, %c0_i32 : i32, i32
  }
  func.func @transform_4(%arg0: i32) -> (i32, i32) {
    %c0_i32 = arith.constant 0 : i32
    %c0_i32_0 = arith.constant 0 : i32
    return %arg0, %c0_i32 : i32, i32
  }
}

</mosaic_0001>

<llo_original>
// kernel: tpu_custom_call.1
$region0: #{tpu_custom_call.1}
  #allocation0 [shape = 'u32[]', space=smem, size = 0x4, offset = 0x4, fixed_abs, tag = 'smem constant byte address 0x4 - core index']
  #allocation1 [shape = 'u32[72,128]{1,0:T(1,128)}', space=vmem, size = 0x9000, scoped, tag = 'internal scratch']
  %s0 = inlined_call_operand.vmem [shape: f32[256,16], index: 0, kind: input, shape index: {}]
  %s1 = inlined_call_operand.vmem [shape: f32[16,128], index: 1, kind: input, shape index: {}]
  %s2 = inlined_call_operand.vmem [shape: f32[128,2], index: 2, kind: input, shape index: {}]
  %s3 = inlined_call_operand.hbm [shape: bf16[256,128], index: 3, kind: output, shape index: {0}]
  %s4 = inlined_call_operand.vmem [shape: f32[256,2], index: 4, kind: output, shape index: {1}]
  %5 = xla_tuple %s3, %s4
  %s6 = sld [smem:[#allocation0]]
  $region53: #{tpu_custom_call.1} parent=0
    _
  %s8 = ssub.s32 1, %s6
  %s9 = scalar_select 0, %s8, %s6
  $region1: #{tpu_custom_call.1} parent=0
    #allocation2 [shape = 'u8[65536]{0}', space=vmem, size = 0x10000, scoped, tag = 'output window, operand 0']
    #allocation3 [shape = 's32[2]{0}', space=sflag, size = 0x8, scoped, tag = 'scoped memory for tpu_custom_call.1']
    %10 = vsyncpa [#allocation3], 0
    %s11 = scalar_lea.sflag [#allocation3], 1
    %12 = vsyncpa %s11, 0
    loop: start=0, step=1, limit=4
    $region2: #{tpu_custom_call.1} parent=1 // loop_pre_header
      _
    $region3: #{tpu_custom_call.1} parent=1 // loop_header
      %s14 = sphi 0, %s18
      %p15 = scmp.ge.s32.totalorder %s14, 4
      %s24 = sphi 0, %s26
      %s27 = sphi 0, %s24
      %s28 = sphi 0, %s27
      %s44 = sphi 0, %s28
      %s48 = sphi 0, %s48
      %s50 = sphi 0, %s48
      %s51 = sphi 0, %s50
      %s65 = sphi 0, %s51
      %s69 = sphi 0, %s69
      %s71 = sphi 0, %s69
      %s72 = sphi 0, %s71
      %s86 = sphi 0, %s72
      %s92 = sphi 0, %s94
      %s95 = sphi 0, %s92
      %s96 = sphi 0, %s95
      %s112 = sphi 0, %s96
      %s118 = sphi 0, %s120
      %s121 = sphi 0, %s118
      %s122 = sphi 0, %s121
      %s138 = sphi 0, %s122
    $region4: #{tpu_custom_call.1} parent=1 // loop_header_branch
      %17 = sbr.rel (%p15) target = $region8
    $region5: #{tpu_custom_call.1} parent=1 // loop_body
      %s19 = ssub.s32 %s14, 1
      %s20 = ssub.s32 %s14, 2
      %s21 = sadd.s32 %s14, 1
      %s22 = ssub.s32 %s14, %s21
      %p23 = scmp.eq.s32.totalorder %s22, 0
      %s25 = sadd.s32 %s24, 1
      %s26 = scalar_select %p23, %s24, %s25
      %p29 = pneg %p23
      %p30 = scmp.eq.s32.totalorder %s14, 1
      %p31 = por %p29, %p30
      %p32 = scmp.ne.s32.totalorder %s24, %s27
      %p33 = scmp.eq.s32.totalorder %s14, 0
      %p34 = por %p32, %p33
      %p35 = scmp.ne.s32.totalorder %s24, %s27
      %p36 = scmp.eq.s32.totalorder %s19, 1
      %p37 = por %p35, %p36
      %p38 = scmp.ne.s32.totalorder %s27, %s28
      %p39 = scmp.eq.s32.totalorder %s19, 0
      %p40 = por %p38, %p39
      %p41 = scmp.ne.s32.totalorder %s27, %s28
      %p42 = scmp.eq.s32.totalorder %s20, 1
      %p43 = por %p41, %p42
      %p45 = scmp.ne.s32.totalorder %s28, %s44
      %p46 = scmp.eq.s32.totalorder %s20, 0
      %p47 = por %p45, %p46
      %s49 = sadd.s32 %s48, 1
      %p52 = scmp.eq.s32.totalorder %s14, 1
      %p53 = scmp.ne.s32.totalorder %s48, %s50
      %p54 = scmp.eq.s32.totalorder %s14, 0
      %p55 = por %p53, %p54
      %p56 = scmp.ne.s32.totalorder %s48, %s50
      %p57 = scmp.eq.s32.totalorder %s19, 1
      %p58 = por %p56, %p57
      %p59 = scmp.ne.s32.totalorder %s50, %s51
      %p60 = scmp.eq.s32.totalorder %s19, 0
      %p61 = por %p59, %p60
      %p62 = scmp.ne.s32.totalorder %s50, %s51
      %p63 = scmp.eq.s32.totalorder %s20, 1
      %p64 = por %p62, %p63
      %p66 = scmp.ne.s32.totalorder %s51, %s65
      %p67 = scmp.eq.s32.totalorder %s20, 0
      %p68 = por %p66, %p67
      %s70 = sadd.s32 %s69, 1
      %p73 = scmp.eq.s32.totalorder %s14, 1
      %p74 = scmp.ne.s32.totalorder %s69, %s71
      %p75 = scmp.eq.s32.totalorder %s14, 0
      %p76 = por %p74, %p75
      %p77 = scmp.ne.s32.totalorder %s69, %s71
      %p78 = scmp.eq.s32.totalorder %s19, 1
      %p79 = por %p77, %p78
      %p80 = scmp.ne.s32.totalorder %s71, %s72
      %p81 = scmp.eq.s32.totalorder %s19, 0
      %p82 = por %p80, %p81
      %p83 = scmp.ne.s32.totalorder %s71, %s72
      %p84 = scmp.eq.s32.totalorder %s20, 1
      %p85 = por %p83, %p84
      %p87 = scmp.ne.s32.totalorder %s72, %s86
      %p88 = scmp.eq.s32.totalorder %s20, 0
      %p89 = por %p87, %p88
      %s90 = ssub.s32 %s14, %s21
      %p91 = scmp.eq.s32.totalorder %s90, 0
      %s93 = sadd.s32 %s92, 1
      %s94 = scalar_select %p91, %s92, %s93
      %p97 = pneg %p91
      %p98 = scmp.eq.s32.totalorder %s14, 1
      %p99 = por %p97, %p98
      %p100 = scmp.ne.s32.totalorder %s92, %s95
      %p101 = scmp.eq.s32.totalorder %s14, 0
      %p102 = por %p100, %p101
      %p103 = scmp.ne.s32.totalorder %s92, %s95
      %p104 = scmp.eq.s32.totalorder %s19, 1
      %p105 = por %p103, %p104
      %p106 = scmp.ne.s32.totalorder %s95, %s96
      %p107 = scmp.eq.s32.totalorder %s19, 0
      %p108 = por %p106, %p107
      %p109 = scmp.ne.s32.totalorder %s95, %s96
      %p110 = scmp.eq.s32.totalorder %s20, 1
      %p111 = por %p109, %p110
      %p113 = scmp.ne.s32.totalorder %s96, %s112
      %p114 = scmp.eq.s32.totalorder %s20, 0
      %p115 = por %p113, %p114
      %s116 = ssub.s32 %s14, %s21
      %p117 = scmp.eq.s32.totalorder %s116, 0
      %s119 = sadd.s32 %s118, 1
      %s120 = scalar_select %p117, %s118, %s119
      %p123 = pneg %p117
      %p124 = scmp.eq.s32.totalorder %s14, 1
      %p125 = por %p123, %p124
      %p126 = scmp.ne.s32.totalorder %s118, %s121
      %p127 = scmp.eq.s32.totalorder %s14, 0
      %p128 = por %p126, %p127
      %p129 = scmp.ne.s32.totalorder %s118, %s121
      %p130 = scmp.eq.s32.totalorder %s19, 1
      %p131 = por %p129, %p130
      %p132 = scmp.ne.s32.totalorder %s121, %s122
      %p133 = scmp.eq.s32.totalorder %s19, 0
      %p134 = por %p132, %p133
      %p135 = scmp.ne.s32.totalorder %s121, %s122
      %p136 = scmp.eq.s32.totalorder %s20, 1
      %p137 = por %p135, %p136
      %p139 = scmp.ne.s32.totalorder %s122, %s138
      %p140 = scmp.eq.s32.totalorder %s20, 0
      %p141 = por %p139, %p140
      %p142 = scmp.le.s32.totalorder 1, %s14
      %p143 = scmp.lt.s32.totalorder %s14, 3
      %p144 = pnand %p142, %p143
      %p145 = pneg %p144
      // Predicated region
      $region9: #{tpu_custom_call.1} parent=5 // pred_check
        _
      $region10: #{tpu_custom_call.1} parent=5 // pred_check_branch
        %147 = sbr.rel (%p144) target = $region12
      $region11: #{tpu_custom_call.1} parent=5 // pred_region
        %s148 = ssub.s32 %s14, 1
        // Predicated region
        $region13: #{tpu_custom_call.1} parent=11 // pred_check
          %p149 = pneg %p61
        $region14: #{tpu_custom_call.1} parent=11 // pred_check_branch
          %151 = sbr.rel (%p149) target = $region16
        $region15: #{tpu_custom_call.1} parent=11 // pred_region
          _
        $region16: #{tpu_custom_call.1} parent=11 // pred_fallthru
          _
        // Predicated region
        $region17: #{tpu_custom_call.1} parent=11 // pred_check
          %p152 = pneg %p82
        $region18: #{tpu_custom_call.1} parent=11 // pred_check_branch
          %154 = sbr.rel (%p152) target = $region20
        $region19: #{tpu_custom_call.1} parent=11 // pred_region
          _
        $region20: #{tpu_custom_call.1} parent=11 // pred_fallthru
          _
      $region12: #{tpu_custom_call.1} parent=5 // pred_fallthru
        _
      %p155 = scmp.lt.s32.totalorder %s14, 2
      // Predicated region
      $region21: #{tpu_custom_call.1} parent=5 // pred_check
        %p156 = pneg %p155
      $region22: #{tpu_custom_call.1} parent=5 // pred_check_branch
        %158 = sbr.rel (%p156) target = $region24
      $region23: #{tpu_custom_call.1} parent=5 // pred_region
        // Predicated region
        $region25: #{tpu_custom_call.1} parent=23 // pred_check
          %p159 = pneg %p34
        $region26: #{tpu_custom_call.1} parent=23 // pred_check_branch
          %161 = sbr.rel (%p159) target = $region28
        $region27: #{tpu_custom_call.1} parent=23 // pred_region
          %s162 = smul.u32 16, %s14
          %p163 = scmp.lt.s32.totalorder %s162, 31
          %s164 = scalar_select %p163, %s162, 31
          %s165 = smul.addr %s164, 8
          %s166 = scalar_lea.vmem %s0, %s165
          %s167 = smul.u32 16, %s14
        $region28: #{tpu_custom_call.1} parent=23 // pred_fallthru
          _
      $region24: #{tpu_custom_call.1} parent=5 // pred_fallthru
        _
      %p168 = scmp.le.s32.totalorder 1, %s14
      %p169 = scmp.lt.s32.totalorder %s14, 3
      %p170 = pnand %p168, %p169
      %p171 = pneg %p170
      // Predicated region
      $region29: #{tpu_custom_call.1} parent=5 // pred_check
        _
      $region30: #{tpu_custom_call.1} parent=5 // pred_check_branch
        %173 = sbr.rel (%p170) target = $region32
      $region31: #{tpu_custom_call.1} parent=5 // pred_region
        %s174 = ssub.s32 %s14, 1
        %s175 = smul.u32 16, %s19
        %p176 = scmp.lt.s32.totalorder %s175, 31
        %s177 = scalar_select %p176, %s175, 31
        %s178 = smul.addr %s177, 8
        %s179 = scalar_lea.vmem %s0, %s178
        %p180 = pneg %p40
        %p181 = pneg %p37
        %p182 = pneg %p61
        %p183 = pneg %p58
        %p184 = pneg %p82
        %p185 = pneg %p79
        %p186 = pneg %p108
        %p187 = pneg %p105
        %s188 = sand.u32 %s95, 1
        %s189 = scalar_lea.sflag [#allocation3], %s188
        %s190 = sand.u32 %s95, 1
        %s191 = smul.addr %s190, 64
        %s192 = scalar_lea.vmem [#allocation2], %s191
        %p193 = pneg %p134
        %p194 = pneg %p131
        %s195 = smul.u32 16, %s19
        %p196 = scmp.lt.s32.totalorder %s195, 31
        %s197 = scalar_select %p196, %s195, 31
        %s198 = smul.addr %s197, 8
        %s199 = scalar_lea.vmem %s4, %s198
        %s200 = smul.u32 16, %s19
        %p201 = scmp.lt.s32.totalorder %s200, 31
        %s202 = scalar_select %p201, %s200, 31
        %s203 = smul.addr %s202, 8
        %s204 = scalar_lea.vmem %s0, %s203
        %s205 = smul.u32 16, %s19
        %s206 = smul.u32 16, %s19
        %s207 = smul.u32 16, %s19
        %p208 = scmp.lt.s32.totalorder %s207, 31
        %s209 = scalar_select %p208, %s207, 31
        %s210 = smul.addr %s209, 8
        %s211 = scalar_lea.vmem %s4, %s210
        %s212 = smul.u32 16, %s19
        %v213 = vld [vmem:[%s204] sm:$0xff]
        %v214 = vld [vmem:[%s204 + $0x8] sm:$0xff]
        %v215 = vld [vmem:[%s204 + $0x10] sm:$0xff]
        %v216 = vld [vmem:[%s204 + $0x18] sm:$0xff]
        %v217 = vld [vmem:[%s204 + $0x20] sm:$0xff]
        %v218 = vld [vmem:[%s204 + $0x28] sm:$0xff]
        %v219 = vld [vmem:[%s204 + $0x30] sm:$0xff]
        %v220 = vld [vmem:[%s204 + $0x38] sm:$0xff]
        %v221 = vld [vmem:[%s204 + $0x40] sm:$0xff]
        %v222 = vld [vmem:[%s204 + $0x48] sm:$0xff]
        %v223 = vld [vmem:[%s204 + $0x50] sm:$0xff]
        %v224 = vld [vmem:[%s204 + $0x58] sm:$0xff]
        %v225 = vld [vmem:[%s204 + $0x60] sm:$0xff]
        %v226 = vld [vmem:[%s204 + $0x68] sm:$0xff]
        %v227 = vld [vmem:[%s204 + $0x70] sm:$0xff]
        %v228 = vld [vmem:[%s204 + $0x78] sm:$0xff]
        %v229 = vld [vmem:[%s1] sm:$0xff]
        %v230 = vld [vmem:[%s1 + $0x8] sm:$0xff]
        %vm231 = vcmask 130048
        %v233 = vsel %vm231, %v213, 0
        %v236 = vsel %vm231, %v214, 0
        %v239 = vsel %vm231, %v215, 0
        %v242 = vsel %vm231, %v216, 0
        %v245 = vsel %vm231, %v217, 0
        %v248 = vsel %vm231, %v218, 0
        %v251 = vsel %vm231, %v219, 0
        %v254 = vsel %vm231, %v220, 0
        %v257 = vsel %vm231, %v221, 0
        %v260 = vsel %vm231, %v222, 0
        %v263 = vsel %vm231, %v223, 0
        %v266 = vsel %vm231, %v224, 0
        %v269 = vsel %vm231, %v225, 0
        %v272 = vsel %vm231, %v226, 0
        %v275 = vsel %vm231, %v227, 0
        %v278 = vsel %vm231, %v228, 0
        %280 = vmatpush.msra.mxu0 0.0
        %281 = vmatpush.msra.mxu0 0.0
        %282 = vmatpush.msra.mxu0 0.0
        %283 = vmatpush.msra.mxu0 0.0
        %284 = vmatpush.msra.mxu0 0.0
        %285 = vmatpush.msra.mxu0 0.0
        %286 = vmatpush.msra.mxu0 0.0
        %287 = vmatpush.msra.mxu0 0.0
        %288 = vmatpush.msra.mxu0 0.0
        %289 = vmatpush.msra.mxu0 0.0
        %290 = vmatpush.msra.mxu0 0.0
        %291 = vmatpush.msra.mxu0 0.0
        %292 = vmatpush.msra.mxu0 0.0
        %293 = vmatpush.msra.mxu0 0.0
        %294 = vmatpush.msra.mxu0 %v230
        %295 = vmatpush.msra.mxu0 %v229
        %296 = vmatmul.f32.gmra.mxu0 %v233
        %v297 = vpop.f32.mrf.mxu0
        %v298 = vadd.f32 0.0, %v297
        %299 = vmatmul.f32.gmra.mxu0 %v236
        %v300 = vpop.f32.mrf.mxu0
        %v301 = vadd.f32 0.0, %v300
        %302 = vmatmul.f32.gmra.mxu0 %v239
        %v303 = vpop.f32.mrf.mxu0
        %v304 = vadd.f32 0.0, %v303
        %305 = vmatmul.f32.gmra.mxu0 %v242
        %v306 = vpop.f32.mrf.mxu0
        %v307 = vadd.f32 0.0, %v306
        %308 = vmatmul.f32.gmra.mxu0 %v245
        %v309 = vpop.f32.mrf.mxu0
        %v310 = vadd.f32 0.0, %v309
        %311 = vmatmul.f32.gmra.mxu0 %v248
        %v312 = vpop.f32.mrf.mxu0
        %v313 = vadd.f32 0.0, %v312
        %314 = vmatmul.f32.gmra.mxu0 %v251
        %v315 = vpop.f32.mrf.mxu0
        %v316 = vadd.f32 0.0, %v315
        %317 = vmatmul.f32.gmra.mxu0 %v254
        %v318 = vpop.f32.mrf.mxu0
        %v319 = vadd.f32 0.0, %v318
        %320 = vmatmul.f32.gmra.mxu0 %v257
        %v321 = vpop.f32.mrf.mxu0
        %v322 = vadd.f32 0.0, %v321
        %323 = vmatmul.f32.gmra.mxu0 %v260
        %v324 = vpop.f32.mrf.mxu0
        %v325 = vadd.f32 0.0, %v324
        %326 = vmatmul.f32.gmra.mxu0 %v263
        %v327 = vpop.f32.mrf.mxu0
        %v328 = vadd.f32 0.0, %v327
        %329 = vmatmul.f32.gmra.mxu0 %v266
        %v330 = vpop.f32.mrf.mxu0
        %v331 = vadd.f32 0.0, %v330
        %332 = vmatmul.f32.gmra.mxu0 %v269
        %v333 = vpop.f32.mrf.mxu0
        %v334 = vadd.f32 0.0, %v333
        %335 = vmatmul.f32.gmra.mxu0 %v272
        %v336 = vpop.f32.mrf.mxu0
        %v337 = vadd.f32 0.0, %v336
        %338 = vmatmul.f32.gmra.mxu0 %v275
        %v339 = vpop.f32.mrf.mxu0
        %v340 = vadd.f32 0.0, %v339
        %341 = vmatmul.f32.gmra.mxu0 %v278
        %v342 = vpop.f32.mrf.mxu0
        %v343 = vadd.f32 0.0, %v342
        %344 = vdwg.mxu0
        %v345 = vpack.c.bf16 %v298, %v298
        %v346 = vpack.c.bf16 %v301, %v301
        %v347 = vpack.c.bf16 %v304, %v304
        %v348 = vpack.c.bf16 %v307, %v307
        %v349 = vpack.c.bf16 %v310, %v310
        %v350 = vpack.c.bf16 %v313, %v313
        %v351 = vpack.c.bf16 %v316, %v316
        %v352 = vpack.c.bf16 %v319, %v319
        %v353 = vpack.c.bf16 %v322, %v322
        %v354 = vpack.c.bf16 %v325, %v325
        %v355 = vpack.c.bf16 %v328, %v328
        %v356 = vpack.c.bf16 %v331, %v331
        %v357 = vpack.c.bf16 %v334, %v334
        %v358 = vpack.c.bf16 %v337, %v337
        %v359 = vpack.c.bf16 %v340, %v340
        %v360 = vpack.c.bf16 %v343, %v343
        %361 = vst [vmem:[%s192] sm:$0xf] %v345
        %362 = vst [vmem:[%s192 + $0x4] sm:$0xf] %v346
        %363 = vst [vmem:[%s192 + $0x8] sm:$0xf] %v347
        %364 = vst [vmem:[%s192 + $0xc] sm:$0xf] %v348
        %365 = vst [vmem:[%s192 + $0x10] sm:$0xf] %v349
        %366 = vst [vmem:[%s192 + $0x14] sm:$0xf] %v350
        %367 = vst [vmem:[%s192 + $0x18] sm:$0xf] %v351
        %368 = vst [vmem:[%s192 + $0x1c] sm:$0xf] %v352
        %369 = vst [vmem:[%s192 + $0x20] sm:$0xf] %v353
        %370 = vst [vmem:[%s192 + $0x24] sm:$0xf] %v354
        %371 = vst [vmem:[%s192 + $0x28] sm:$0xf] %v355
        %372 = vst [vmem:[%s192 + $0x2c] sm:$0xf] %v356
        %373 = vst [vmem:[%s192 + $0x30] sm:$0xf] %v357
        %374 = vst [vmem:[%s192 + $0x34] sm:$0xf] %v358
        %375 = vst [vmem:[%s192 + $0x38] sm:$0xf] %v359
        %376 = vst [vmem:[%s192 + $0x3c] sm:$0xf] %v360
        %v377 = vld [vmem:[%s2] sm:$0xff]
        %v378 = vld [vmem:[%s2 + $0x8] sm:$0xff]
        %v379 = vld [vmem:[%s2 + $0x10] sm:$0xff]
        %v380 = vld [vmem:[%s2 + $0x18] sm:$0xff]
        %v381 = vld [vmem:[%s2 + $0x20] sm:$0xff]
        %v382 = vld [vmem:[%s2 + $0x28] sm:$0xff]
        %v383 = vld [vmem:[%s2 + $0x30] sm:$0xff]
        %v384 = vld [vmem:[%s2 + $0x38] sm:$0xff]
        %v385 = vld [vmem:[%s2 + $0x40] sm:$0xff]
        %v386 = vld [vmem:[%s2 + $0x48] sm:$0xff]
        %v387 = vld [vmem:[%s2 + $0x50] sm:$0xff]
        %v388 = vld [vmem:[%s2 + $0x58] sm:$0xff]
        %v389 = vld [vmem:[%s2 + $0x60] sm:$0xff]
        %v390 = vld [vmem:[%s2 + $0x68] sm:$0xff]
        %v391 = vld [vmem:[%s2 + $0x70] sm:$0xff]
        %v392 = vld [vmem:[%s2 + $0x78] sm:$0xff]
        %393 = vmatpush.msra.mxu0 %v392
        %394 = vmatpush.msra.mxu0 %v391
        %395 = vmatpush.msra.mxu0 %v390
        %396 = vmatpush.msra.mxu0 %v389
        %397 = vmatpush.msra.mxu0 %v388
        %398 = vmatpush.msra.mxu0 %v387
        %399 = vmatpush.msra.mxu0 %v386
        %400 = vmatpush.msra.mxu0 %v385
        %401 = vmatpush.msra.mxu0 %v384
        %402 = vmatpush.msra.mxu0 %v383
        %403 = vmatpush.msra.mxu0 %v382
        %404 = vmatpush.msra.mxu0 %v381
        %405 = vmatpush.msra.mxu0 %v380
        %406 = vmatpush.msra.mxu0 %v379
        %407 = vmatpush.msra.mxu0 %v378
        %408 = vmatpush.msra.mxu0 %v377
        %409 = vmatmul.f32.gmra.mxu0 %v298
        %v410 = vpop.f32.mrf.mxu0
        %v411 = vadd.f32 0.0, %v410
        %412 = vmatmul.f32.gmra.mxu0 %v301
        %v413 = vpop.f32.mrf.mxu0
        %v414 = vadd.f32 0.0, %v413
        %415 = vmatmul.f32.gmra.mxu0 %v304
        %v416 = vpop.f32.mrf.mxu0
        %v417 = vadd.f32 0.0, %v416
        %418 = vmatmul.f32.gmra.mxu0 %v307
        %v419 = vpop.f32.mrf.mxu0
        %v420 = vadd.f32 0.0, %v419
        %421 = vmatmul.f32.gmra.mxu0 %v310
        %v422 = vpop.f32.mrf.mxu0
        %v423 = vadd.f32 0.0, %v422
        %424 = vmatmul.f32.gmra.mxu0 %v313
        %v425 = vpop.f32.mrf.mxu0
        %v426 = vadd.f32 0.0, %v425
        %427 = vmatmul.f32.gmra.mxu0 %v316
        %v428 = vpop.f32.mrf.mxu0
        %v429 = vadd.f32 0.0, %v428
        %430 = vmatmul.f32.gmra.mxu0 %v319
        %v431 = vpop.f32.mrf.mxu0
        %v432 = vadd.f32 0.0, %v431
        %433 = vmatmul.f32.gmra.mxu0 %v322
        %v434 = vpop.f32.mrf.mxu0
        %v435 = vadd.f32 0.0, %v434
        %436 = vmatmul.f32.gmra.mxu0 %v325
        %v437 = vpop.f32.mrf.mxu0
        %v438 = vadd.f32 0.0, %v437
        %439 = vmatmul.f32.gmra.mxu0 %v328
        %v440 = vpop.f32.mrf.mxu0
        %v441 = vadd.f32 0.0, %v440
        %442 = vmatmul.f32.gmra.mxu0 %v331
        %v443 = vpop.f32.mrf.mxu0
        %v444 = vadd.f32 0.0, %v443
        %445 = vmatmul.f32.gmra.mxu0 %v334
        %v446 = vpop.f32.mrf.mxu0
        %v447 = vadd.f32 0.0, %v446
        %448 = vmatmul.f32.gmra.mxu0 %v337
        %v449 = vpop.f32.mrf.mxu0
        %v450 = vadd.f32 0.0, %v449
        %451 = vmatmul.f32.gmra.mxu0 %v340
        %v452 = vpop.f32.mrf.mxu0
        %v453 = vadd.f32 0.0, %v452
        %454 = vmatmul.f32.gmra.mxu0 %v343
        %v455 = vpop.f32.mrf.mxu0
        %v456 = vadd.f32 0.0, %v455
        %457 = vdwg.mxu0
        %vm458 = vcmask 15360
        %459 = vst.msk [vmem:[%s211] sm:$0xff] %vm458, %v411
        %460 = vst.msk [vmem:[%s211 + $0x8] sm:$0xff] %vm458, %v414
        %461 = vst.msk [vmem:[%s211 + $0x10] sm:$0xff] %vm458, %v417
        %462 = vst.msk [vmem:[%s211 + $0x18] sm:$0xff] %vm458, %v420
        %463 = vst.msk [vmem:[%s211 + $0x20] sm:$0xff] %vm458, %v423
        %464 = vst.msk [vmem:[%s211 + $0x28] sm:$0xff] %vm458, %v426
        %465 = vst.msk [vmem:[%s211 + $0x30] sm:$0xff] %vm458, %v429
        %466 = vst.msk [vmem:[%s211 + $0x38] sm:$0xff] %vm458, %v432
        %467 = vst.msk [vmem:[%s211 + $0x40] sm:$0xff] %vm458, %v435
        %468 = vst.msk [vmem:[%s211 + $0x48] sm:$0xff] %vm458, %v438
        %469 = vst.msk [vmem:[%s211 + $0x50] sm:$0xff] %vm458, %v441
        %470 = vst.msk [vmem:[%s211 + $0x58] sm:$0xff] %vm458, %v444
        %471 = vst.msk [vmem:[%s211 + $0x60] sm:$0xff] %vm458, %v447
        %472 = vst.msk [vmem:[%s211 + $0x68] sm:$0xff] %vm458, %v450
        %473 = vst.msk [vmem:[%s211 + $0x70] sm:$0xff] %vm458, %v453
        %474 = vst.msk [vmem:[%s211 + $0x78] sm:$0xff] %vm458, %v456
        %s475 = sand.u32 %s95, 1
        %s476 = scalar_lea.sflag [#allocation3], %s475
        %s477 = sand.u32 %s95, 1
        %s478 = smul.addr %s477, 64
        %s479 = scalar_lea.vmem [#allocation2], %s478
        %s480 = smul.u32 16, %s19
        %p481 = scmp.lt.s32.totalorder %s480, 31
        %s482 = scalar_select %p481, %s480, 31
        %s483 = smul.addr %s482, 8
        %s484 = scalar_lea.vmem %s4, %s483
        // Predicated region
        $region33: #{tpu_custom_call.1} parent=31 // pred_check
          %p485 = pneg %p105
        $region34: #{tpu_custom_call.1} parent=31 // pred_check_branch
          %487 = sbr.rel (%p485) target = $region36
        $region35: #{tpu_custom_call.1} parent=31 // pred_region
          %s488 = smul.u32 16, %s19
          %490 = vsyncadd %s476, 0
          %s491 = smul.addr %s488, 4
          %s492 = scalar_lea.hbm %s3, %s491
          %s493 = sshll.u32 %s479, 4
          %s494 = int_to_ptr.vmem [resolvable:$true] %s493
          %s495 = sshll.u32 %s492, 4
          %s496 = int_to_ptr.hbm [resolvable:$true] %s495
          %501 = dma.vmem_to_hbm [thread:$0]  %s494, 1024, %s496, %s476, 64, 64, 4
        $region36: #{tpu_custom_call.1} parent=31 // pred_fallthru
          _
        // Predicated region
        $region37: #{tpu_custom_call.1} parent=31 // pred_check
          %p502 = pneg %p131
        $region38: #{tpu_custom_call.1} parent=31 // pred_check_branch
          %504 = sbr.rel (%p502) target = $region40
        $region39: #{tpu_custom_call.1} parent=31 // pred_region
          %s505 = smul.u32 16, %s19
        $region40: #{tpu_custom_call.1} parent=31 // pred_fallthru
          _
      $region32: #{tpu_custom_call.1} parent=5 // pred_fallthru
        _
      %p506 = scmp.le.s32.totalorder 2, %s14
      // Predicated region
      $region41: #{tpu_custom_call.1} parent=5 // pred_check
        %p507 = pneg %p506
      $region42: #{tpu_custom_call.1} parent=5 // pred_check_branch
        %509 = sbr.rel (%p507) target = $region44
      $region43: #{tpu_custom_call.1} parent=5 // pred_region
        %s510 = ssub.s32 %s14, 2
        // Predicated region
        $region45: #{tpu_custom_call.1} parent=43 // pred_check
          %p511 = pneg %p111
        $region46: #{tpu_custom_call.1} parent=43 // pred_check_branch
          %513 = sbr.rel (%p511) target = $region48
        $region47: #{tpu_custom_call.1} parent=43 // pred_region
          %s514 = sand.u32 %s96, 1
          %s515 = scalar_lea.sflag [#allocation3], %s514
          %s516 = sand.u32 %s96, 1
          %s517 = smul.addr %s516, 64
          %s518 = scalar_lea.vmem [#allocation2], %s517
          %520 = dma.done %s515, 1024
        $region48: #{tpu_custom_call.1} parent=43 // pred_fallthru
          _
        // Predicated region
        $region49: #{tpu_custom_call.1} parent=43 // pred_check
          %p521 = pneg %p137
        $region50: #{tpu_custom_call.1} parent=43 // pred_check_branch
          %523 = sbr.rel (%p521) target = $region52
        $region51: #{tpu_custom_call.1} parent=43 // pred_region
          %s524 = smul.u32 16, %s20
          %p525 = scmp.lt.s32.totalorder %s524, 31
          %s526 = scalar_select %p525, %s524, 31
          %s527 = smul.addr %s526, 8
          %s528 = scalar_lea.vmem %s4, %s527
        $region52: #{tpu_custom_call.1} parent=43 // pred_fallthru
          _
      $region44: #{tpu_custom_call.1} parent=5 // pred_fallthru
        _
    $region6: #{tpu_custom_call.1} parent=1 // loop_footer
      %s18 = sadd.s32 1, %s14
    $region7: #{tpu_custom_call.1} parent=1 // loop_footer_branch
      %13 = sbr.rel target = $region3
    $region8: #{tpu_custom_call.1} parent=1 // loop_exit
      _
    %529 = vsyncpa [#allocation3], 1
    %s530 = scalar_lea.sflag [#allocation3], 1
    %531 = vsyncpa %s530, 1

</llo_original>
